<compile_context>
chip_gen: v5e
topology: v5e:2x2
jax: 0.10.0
libtpu: 0.0.40
codegen_flags: <defaults>
</compile_context>

<pallas_src>
import jax
import jax.numpy as jnp
from jax.experimental import pallas as pl
from jax.experimental.pallas import tpu as pltpu

LANES = 128
SUBLANES = 8
CHUNK = SUBLANES * LANES   # 1024 elements: kernel-aligned granule
TILE_ROWS = 8192           # rows of 128 lanes per grid step (4 MiB f32 / input / buffer)
MIN_BLOCKS = 4             # keep >=4 grid steps on big inputs (v7x megacore sharding)


def _round_up(x, m):
    return ((x + m - 1) // m) * m


def _make_kernel(tile_rows, last_block_rows, mask_last):
    """Per-block kernel. tile_rows / last_block_rows / mask_last are static."""

    def _reduce_store(inter_ref, sums_ref, prod, both):
        # (tile_rows,128) -> (8,128) lane/sublane-parallel partial sums: pure
        # VPU vreg adds. The final tiny cross-lane reduction happens in the
        # wrapper on the (num_blocks,8,128) outputs.
        inter_ref[...] = prod.reshape(tile_rows // SUBLANES, SUBLANES, LANES).sum(axis=0)
        sums_ref[...] = both.reshape(tile_rows // SUBLANES, SUBLANES, LANES).sum(axis=0)

    def kernel(x_ref, t_ref, inter_ref, sums_ref):
        x = x_ref[...].astype(jnp.float32)
        t = t_ref[...].astype(jnp.float32)

        iflat = jax.nn.sigmoid(-x)   # == 1 - sigmoid(x); EUP, saves a VPU subtract
        tflat = 1.0 - t

        prod = iflat * tflat         # -> intersection
        both = iflat + tflat         # -> denominator (sum(i) + sum(t) fused)

        if mask_last:
            is_last = pl.program_id(0) == pl.num_programs(0) - 1

            @pl.when(jnp.logical_not(is_last))
            def _():
                _reduce_store(inter_ref, sums_ref, prod, both)

            @pl.when(is_last)
            def _():
                # Block-local row index vs. statically-known valid-row count:
                # only the last block pays the iota/compare/select cost, and
                # there is no global element index to overflow int32.
                row = jax.lax.broadcasted_iota(jnp.int32, (tile_rows, LANES), 0)
                valid = row < last_block_rows
                # jnp.where (not multiply-by-mask) so NaN/Inf from the OOB
                # portion of the partial block cannot leak into the sums.
                _reduce_store(inter_ref, sums_ref,
                              jnp.where(valid, prod, 0.0),
                              jnp.where(valid, both, 0.0))
        else:
            _reduce_store(inter_ref, sums_ref, prod, both)

    return kernel


def inv_soft_dice_loss(logits, targets, *, tile_rows=TILE_ROWS):
    """Pallas implementation of InvSoftDiceLoss.forward (returns scalar f32)."""
    n = logits.size
    x = jnp.ravel(logits)    # keep native dtype (bf16 OK); cast in-kernel
    t = jnp.ravel(targets)

    smooth = jnp.float32(1.0)

    # Split: a 1024-aligned prefix streams through the kernel; the <1024-elem
    # tail (if any) is summed in plain JAX (no full-array pad/concat copy).
    n_main = (n // CHUNK) * CHUNK
    if n_main < n:
        x_tail = x[n_main:].astype(jnp.float32)
        t_tail = t[n_main:].astype(jnp.float32)
        i_tail = jax.nn.sigmoid(-x_tail)
        f_tail = 1.0 - t_tail
        tail_inter = jnp.sum(i_tail * f_tail)
        tail_sums = jnp.sum(i_tail) + jnp.sum(f_tail)
    else:
        tail_inter = jnp.float32(0.0)
        tail_sums = jnp.float32(0.0)

    if n_main == 0:
        # Too small for a kernel launch; the JAX tail above covers everything.
        return 1.0 - (2.0 * tail_inter + smooth) / (tail_sums + smooth)

    x_main = x if n_main == n else x[:n_main]
    t_main = t if n_main == n else t[:n_main]

    rows = n_main // LANES                 # multiple of SUBLANES
    x2 = x_main.reshape(rows, LANES)       # contiguous reshape: no copy
    t2 = t_main.reshape(rows, LANES)

    # Tile selection: as big as possible (amortize per-step overhead), but keep
    # >= MIN_BLOCKS grid steps on large inputs so both v7x TCs get work.
    tr = min(int(tile_rows), rows)
    if rows >= MIN_BLOCKS * SUBLANES:
        tr = min(tr, _round_up(pl.cdiv(rows, MIN_BLOCKS), SUBLANES))
    tr = max(SUBLANES, (tr // SUBLANES) * SUBLANES)

    num_blocks = pl.cdiv(rows, tr)
    last_block_rows = rows - (num_blocks - 1) * tr
    mask_last = last_block_rows != tr      # only a partial last block needs masking

    kernel = _make_kernel(tr, last_block_rows, mask_last)

    out_bytes = 2 * num_blocks * SUBLANES * LANES * 4
    cost = pl.CostEstimate(
        flops=6 * n_main,
        transcendentals=n_main,
        bytes_accessed=int(x2.size) * x2.dtype.itemsize
        + int(t2.size) * t2.dtype.itemsize
        + out_bytes,
    )

    inter, sums = pl.pallas_call(
        kernel,
        out_shape=(
            jax.ShapeDtypeStruct((num_blocks, SUBLANES, LANES), jnp.float32),
            jax.ShapeDtypeStruct((num_blocks, SUBLANES, LANES), jnp.float32),
        ),
        grid_spec=pltpu.PrefetchScalarGridSpec(
            num_scalar_prefetch=0,
            grid=(num_blocks,),
            in_specs=[
                pl.BlockSpec((tr, LANES), lambda i: (i, 0)),
                pl.BlockSpec((tr, LANES), lambda i: (i, 0)),
            ],
            out_specs=[
                pl.BlockSpec((None, SUBLANES, LANES), lambda i: (i, 0, 0)),
                pl.BlockSpec((None, SUBLANES, LANES), lambda i: (i, 0, 0)),
            ],
        ),
        compiler_params=pltpu.CompilerParams(
            dimension_semantics=("parallel",),
            vmem_limit_bytes=32 * 1024 * 1024,
        ),
        cost_estimate=cost,
    )(x2, t2)

    # Final tiny reduction + loss epilogue (negligible vs the streaming pass).
    intersection = jnp.sum(inter) + tail_inter
    denom = jnp.sum(sums) + tail_sums
    return 1.0 - (2.0 * intersection + smooth) / (denom + smooth)


def _reference(logits, targets):
    # Pure-JAX reference matching the PyTorch forward exactly.
    smooth = 1.0
    s = jax.nn.sigmoid(logits.astype(jnp.float32))
    iflat = (1.0 - s).ravel()
    tflat = (1.0 - targets.astype(jnp.float32)).ravel()
    intersection = jnp.sum(iflat * tflat)
    return 1.0 - (2.0 * intersection + smooth) / (jnp.sum(iflat) + jnp.sum(tflat) + smooth)


if __name__ == "__main__":
    key = jax.random.PRNGKey(0)
    k1, k2, k3, k4 = jax.random.split(key, 4)

    # Case 1: aligned size. NCHW: batch=2, channels=4, spatial=16 (n=2048).
    logits = jax.random.normal(k1, (2, 4, 16, 16), dtype=jnp.float32)
    targets = (jax.random.uniform(k2, (2, 4, 16, 16)) > 0.5).astype(jnp.float32)
    out = jax.block_until_ready(inv_soft_dice_loss(logits, targets))
    ref = _reference(logits, targets)
    assert jnp.allclose(out, ref, atol=1e-5, rtol=1e-5), (out, ref)

    # Case 2: unaligned size (n=5248) -> exercises the multi-block grid, the
    # masked partial last block (rows=40, tile=16), and the plain-JAX tail.
    logits2 = jax.random.normal(k3, (2, 4, 16, 41), dtype=jnp.float32)
    targets2 = (jax.random.uniform(k4, (2, 4, 16, 41)) > 0.5).astype(jnp.float32)
    out2 = jax.block_until_ready(inv_soft_dice_loss(logits2, targets2))
    ref2 = _reference(logits2, targets2)
    assert jnp.allclose(out2, ref2, atol=1e-5, rtol=1e-5), (out2, ref2)

    print("KERNEL_OK")
</pallas_src>

<mosaic_0001>
module attributes {stable_mosaic.version = 11 : i64} {
  func.func @kernel(%arg0: i32, %arg1: memref<16x128xf32, #tpu.memory_space<vmem>>, %arg2: memref<16x128xf32, #tpu.memory_space<vmem>>, %arg3: memref<1x8x128xf32, #tpu.memory_space<vmem>>, %arg4: memref<1x8x128xf32, #tpu.memory_space<vmem>>) attributes {dimension_semantics = [#tpu.dimension_semantics<parallel>], iteration_bounds = array<i64: 1>, scalar_prefetch = 0 : i64, scratch_operands = 0 : i64, tpu.core_type = #tpu.core_type<tc>, window_params = [{transform_indices = @transform_0, window_bounds = array<i64: 16, 128>}, {transform_indices = @transform_1, window_bounds = array<i64: 16, 128>}, {transform_indices = @transform_2, window_bounds = array<i64: 1, 8, 128>}, {transform_indices = @transform_3, window_bounds = array<i64: 1, 8, 128>}]} {
    %c0 = arith.constant 0 : index
    %c0_0 = arith.constant 0 : index
    %0 = vector.load %arg1[%c0, %c0_0] : memref<16x128xf32, #tpu.memory_space<vmem>>, vector<16x128xf32>
    %c0_1 = arith.constant 0 : index
    %c0_2 = arith.constant 0 : index
    %1 = vector.load %arg2[%c0_1, %c0_2] : memref<16x128xf32, #tpu.memory_space<vmem>>, vector<16x128xf32>
    %cst = arith.constant 0.000000e+00 : f32
    %2 = vector.broadcast %cst : f32 to vector<16x128xf32>
    %3 = arith.subf %2, %0 : vector<16x128xf32>
    %4 = arith.negf %3 : vector<16x128xf32>
    %5 = math.exp %4 : vector<16x128xf32>
    %cst_3 = arith.constant 1.000000e+00 : f32
    %6 = vector.broadcast %cst_3 : f32 to vector<16x128xf32>
    %7 = arith.addf %6, %5 : vector<16x128xf32>
    %8 = arith.divf %6, %7 : vector<16x128xf32>
    %cst_4 = arith.constant 1.000000e+00 : f32
    %9 = vector.broadcast %cst_4 : f32 to vector<16x128xf32>
    %10 = arith.subf %9, %1 : vector<16x128xf32>
    %11 = arith.mulf %8, %10 : vector<16x128xf32>
    %12 = arith.addf %8, %10 : vector<16x128xf32>
    %13 = vector.shape_cast %11 : vector<16x128xf32> to vector<2x8x128xf32>
    %cst_5 = arith.constant dense<0.000000e+00> : vector<8x128xf32>
    %14 = vector.multi_reduction <add>, %13, %cst_5 [0] : vector<2x8x128xf32> to vector<8x128xf32>
    %c0_6 = arith.constant 0 : index
    %c0_7 = arith.constant 0 : index
    %c0_8 = arith.constant 0 : index
    %15 = vector.load %arg3[%c0_6, %c0_7, %c0_8] : memref<1x8x128xf32, #tpu.memory_space<vmem>>, vector<1x8x128xf32>
    %16 = vector.shape_cast %15 : vector<1x8x128xf32> to vector<8x128xf32>
    %17 = vector.shape_cast %14 : vector<8x128xf32> to vector<1x8x128xf32>
    tpu.vector_store %arg3[%c0_6, %c0_7, %c0_8], %17 {strides = array<i32>} : memref<1x8x128xf32, #tpu.memory_space<vmem>>, vector<1x8x128xf32>,
    %18 = vector.shape_cast %12 : vector<16x128xf32> to vector<2x8x128xf32>
    %cst_9 = arith.constant dense<0.000000e+00> : vector<8x128xf32>
    %19 = vector.multi_reduction <add>, %18, %cst_9 [0] : vector<2x8x128xf32> to vector<8x128xf32>
    %c0_10 = arith.constant 0 : index
    %c0_11 = arith.constant 0 : index
    %c0_12 = arith.constant 0 : index
    %20 = vector.load %arg4[%c0_10, %c0_11, %c0_12] : memref<1x8x128xf32, #tpu.memory_space<vmem>>, vector<1x8x128xf32>
    %21 = vector.shape_cast %20 : vector<1x8x128xf32> to vector<8x128xf32>
    %22 = vector.shape_cast %19 : vector<8x128xf32> to vector<1x8x128xf32>
    tpu.vector_store %arg4[%c0_10, %c0_11, %c0_12], %22 {strides = array<i32>} : memref<1x8x128xf32, #tpu.memory_space<vmem>>, vector<1x8x128xf32>,
    return
  }
  func.func @transform_0(%arg0: i32) -> (i32, i32) {
    %c0_i32 = arith.constant 0 : i32
    %c0_i32_0 = arith.constant 0 : i32
    return %arg0, %c0_i32 : i32, i32
  }
  func.func @transform_1(%arg0: i32) -> (i32, i32) {
    %c0_i32 = arith.constant 0 : i32
    %c0_i32_0 = arith.constant 0 : i32
    return %arg0, %c0_i32 : i32, i32
  }
  func.func @transform_2(%arg0: i32) -> (i32, i32, i32) {
    %c0_i32 = arith.constant 0 : i32
    %c0_i32_0 = arith.constant 0 : i32
    %c0_i32_1 = arith.constant 0 : i32
    return %arg0, %c0_i32, %c0_i32_0 : i32, i32, i32
  }
  func.func @transform_3(%arg0: i32) -> (i32, i32, i32) {
    %c0_i32 = arith.constant 0 : i32
    %c0_i32_0 = arith.constant 0 : i32
    %c0_i32_1 = arith.constant 0 : i32
    return %arg0, %c0_i32, %c0_i32_0 : i32, i32, i32
  }
}

</mosaic_0001>

<llo_original>
// kernel: tpu_custom_call.1
$region0: #{tpu_custom_call.1}
  #allocation0 [shape = 'u32[]', space=smem, size = 0x4, offset = 0x4, fixed_abs, tag = 'smem constant byte address 0x4 - core index']
  #allocation1 [shape = 'u32[72,128]{1,0:T(1,128)}', space=vmem, size = 0x9000, scoped, tag = 'internal scratch']
  %s0 = inlined_call_operand.hbm [shape: f32[16,128], index: 0, kind: input, shape index: {}]
  %s1 = inlined_call_operand.hbm [shape: f32[16,128], index: 1, kind: input, shape index: {}]
  %s2 = inlined_call_operand.hbm [shape: f32[1,8,128], index: 2, kind: output, shape index: {0}]
  %s3 = inlined_call_operand.hbm [shape: f32[1,8,128], index: 3, kind: output, shape index: {1}]
  %4 = xla_tuple %s2, %s3
  %s5 = sld [smem:[#allocation0]]
  $region34: #{tpu_custom_call.1} parent=0
    _
  %s7 = ssub.s32 1, %s5
  %s8 = scalar_select 0, %s7, %s5
  $region1: #{tpu_custom_call.1} parent=0
    #allocation2 [shape = 'u8[8192]{0}', space=vmem, size = 0x2000, scoped, tag = 'input window, operand 0, single buffered']
    #allocation3 [shape = 's32[1]{0}', space=sflag, size = 0x4, scoped, tag = 'scoped memory for tpu_custom_call.1']
    #allocation4 [shape = 's32[1]{0}', space=sflag, size = 0x4, scoped, tag = 'scoped memory for tpu_custom_call.1']
    #allocation5 [shape = 'u8[8192]{0}', space=vmem, size = 0x2000, scoped, tag = 'input window, operand 1, single buffered']
    #allocation6 [shape = 's32[1]{0}', space=sflag, size = 0x4, scoped, tag = 'scoped memory for tpu_custom_call.1']
    #allocation7 [shape = 'u8[4096]{0}', space=vmem, size = 0x1000, scoped, tag = 'output window, operand 0, single buffered']
    #allocation8 [shape = 'u8[4096]{0}', space=vmem, size = 0x1000, scoped, tag = 'output window, operand 1, single buffered']
    #allocation9 [shape = 's32[1]{0}', space=sflag, size = 0x4, scoped, tag = 'scoped memory for tpu_custom_call.1']
    %9 = vsyncpa [#allocation3], 0
    %10 = vsyncpa [#allocation6], 0
    %11 = vsyncpa [#allocation4], 0
    %12 = vsyncpa [#allocation9], 0
    // Predicated region
    $region2: #{tpu_custom_call.1} parent=1 // pred_check
      _
    $region3: #{tpu_custom_call.1} parent=1 // pred_check_branch
      %14 = sbr.rel (0) target = $region5
    $region4: #{tpu_custom_call.1} parent=1 // pred_region
      %16 = vsyncadd [#allocation3], 0
      %s17 = sshll.u32 %s0, 4
      %s18 = int_to_ptr.hbm [resolvable:$true] %s17
      %s19 = sshll.u32 [#allocation2], 4
      %s20 = int_to_ptr.vmem [resolvable:$true] %s19
      %25 = dma.hbm_to_vmem [thread:$0]  %s18, 256, %s20, [#allocation3], 128, 128, 8
    $region5: #{tpu_custom_call.1} parent=1 // pred_fallthru
      _
    // Predicated region
    $region6: #{tpu_custom_call.1} parent=1 // pred_check
      _
    $region7: #{tpu_custom_call.1} parent=1 // pred_check_branch
      %27 = sbr.rel (0) target = $region9
    $region8: #{tpu_custom_call.1} parent=1 // pred_region
      %29 = vsyncadd [#allocation6], 0
      %s30 = sshll.u32 %s1, 4
      %s31 = int_to_ptr.hbm [resolvable:$true] %s30
      %s32 = sshll.u32 [#allocation5], 4
      %s33 = int_to_ptr.vmem [resolvable:$true] %s32
      %38 = dma.hbm_to_vmem [thread:$0]  %s31, 256, %s33, [#allocation6], 128, 128, 8
    $region9: #{tpu_custom_call.1} parent=1 // pred_fallthru
      _
    // Predicated region
    $region10: #{tpu_custom_call.1} parent=1 // pred_check
      _
    $region11: #{tpu_custom_call.1} parent=1 // pred_check_branch
      %40 = sbr.rel (0) target = $region13
    $region12: #{tpu_custom_call.1} parent=1 // pred_region
      %42 = dma.done [#allocation3], 256
    $region13: #{tpu_custom_call.1} parent=1 // pred_fallthru
      _
    // Predicated region
    $region14: #{tpu_custom_call.1} parent=1 // pred_check
      _
    $region15: #{tpu_custom_call.1} parent=1 // pred_check_branch
      %44 = sbr.rel (0) target = $region17
    $region16: #{tpu_custom_call.1} parent=1 // pred_region
      %46 = dma.done [#allocation6], 256
    $region17: #{tpu_custom_call.1} parent=1 // pred_fallthru
      _
    %v47 = vld [vmem:[#allocation2] sm:$0xff]
    %v48 = vld [vmem:[#allocation2 + $0x8] sm:$0xff]
    %v49 = vld [vmem:[#allocation5] sm:$0xff]
    %v50 = vld [vmem:[#allocation5 + $0x8] sm:$0xff]
    %v51 = vsub.f32 0.0, %v47
    %v52 = vsub.f32 0.0, %v48
    %v53 = vxor.u32 %v51, 2147483648
    %v54 = vxor.u32 %v52, 2147483648
    %v55 = vmul.f32 %v53, 1.442695
    %v56 = vpow.pop %v55
    %v57 = vmul.f32 %v54, 1.442695
    %v58 = vpow.pop %v57
    %v59 = vadd.f32 %v56, 1.0
    %v60 = vadd.f32 %v58, 1.0
    %v61 = vrcp.pop %v59
    %v62 = vmul.f32 %v59, %v61
    %v63 = vsub.f32 1.0, %v62
    %v64 = vmul.f32 %v61, %v63
    %v65 = vadd.f32 %v61, %v64
    %vm66 = vweird.f32 %v59
    %vm67 = vweird.f32 %v61
    %vm68 = vmor %vm66, %vm67
    %v69 = vsel %vm68, %v61, %v65
    %v70 = vand.u32 2147483647, %v59
    %vm71 = vcmp.eq.f32.partialorder %v70, 8.507059e+37
    %v72 = vand.u32 %v59, 2147483648
    %v73 = vor.u32 1.1754944e-38, %v72
    %v74 = vsel %vm71, %v73, %v69
    %v75 = vmul.f32 1.0, %v74
    %v76 = vrcp.pop %v60
    %v77 = vmul.f32 %v60, %v76
    %v78 = vsub.f32 1.0, %v77
    %v79 = vmul.f32 %v76, %v78
    %v80 = vadd.f32 %v76, %v79
    %vm81 = vweird.f32 %v60
    %vm82 = vweird.f32 %v76
    %vm83 = vmor %vm81, %vm82
    %v84 = vsel %vm83, %v76, %v80
    %v85 = vand.u32 2147483647, %v60
    %vm86 = vcmp.eq.f32.partialorder %v85, 8.507059e+37
    %v87 = vand.u32 %v60, 2147483648
    %v88 = vor.u32 1.1754944e-38, %v87
    %v89 = vsel %vm86, %v88, %v84
    %v90 = vmul.f32 1.0, %v89
    %v91 = vsub.f32 1.0, %v49
    %v92 = vsub.f32 1.0, %v50
    %v93 = vmul.f32 %v75, %v91
    %v94 = vmul.f32 %v90, %v92
    %v95 = vadd.f32 %v75, %v91
    %v96 = vadd.f32 %v90, %v92
    %v97 = vadd.f32 %v93, %v94
    %98 = vst [vmem:[#allocation7] sm:$0xff] %v97
    %v99 = vadd.f32 %v95, %v96
    %100 = vst [vmem:[#allocation8] sm:$0xff] %v99
    // Predicated region
    $region18: #{tpu_custom_call.1} parent=1 // pred_check
      _
    $region19: #{tpu_custom_call.1} parent=1 // pred_check_branch
      %102 = sbr.rel (0) target = $region21
    $region20: #{tpu_custom_call.1} parent=1 // pred_region
      %104 = vsyncadd [#allocation4], 0
      %s106 = sshll.u32 [#allocation7], 4
      %s107 = int_to_ptr.vmem [resolvable:$true] %s106
      %s108 = sshll.u32 %s2, 4
      %s109 = int_to_ptr.hbm [resolvable:$true] %s108
      %111 = dma.vmem_to_hbm [thread:$0]  %s107, 128, %s109, [#allocation4]
    $region21: #{tpu_custom_call.1} parent=1 // pred_fallthru
      _
    // Predicated region
    $region22: #{tpu_custom_call.1} parent=1 // pred_check
      _
    $region23: #{tpu_custom_call.1} parent=1 // pred_check_branch
      %113 = sbr.rel (0) target = $region25
    $region24: #{tpu_custom_call.1} parent=1 // pred_region
      %115 = vsyncadd [#allocation9], 0
      %s117 = sshll.u32 [#allocation8], 4
      %s118 = int_to_ptr.vmem [resolvable:$true] %s117
      %s119 = sshll.u32 %s3, 4
      %s120 = int_to_ptr.hbm [resolvable:$true] %s119
      %122 = dma.vmem_to_hbm [thread:$0]  %s118, 128, %s120, [#allocation9]
    $region25: #{tpu_custom_call.1} parent=1 // pred_fallthru
      _
    // Predicated region
    $region26: #{tpu_custom_call.1} parent=1 // pred_check
      _
    $region27: #{tpu_custom_call.1} parent=1 // pred_check_branch
      %124 = sbr.rel (0) target = $region29
    $region28: #{tpu_custom_call.1} parent=1 // pred_region
      %126 = dma.done [#allocation4], 128
    $region29: #{tpu_custom_call.1} parent=1 // pred_fallthru
      _
    // Predicated region
    $region30: #{tpu_custom_call.1} parent=1 // pred_check
      _
    $region31: #{tpu_custom_call.1} parent=1 // pred_check_branch
      %128 = sbr.rel (0) target = $region33
    $region32: #{tpu_custom_call.1} parent=1 // pred_region
      %130 = dma.done [#allocation9], 128
    $region33: #{tpu_custom_call.1} parent=1 // pred_fallthru
      _
    %131 = vsyncpa [#allocation3], 1
    %132 = vsyncpa [#allocation6], 1
    %133 = vsyncpa [#allocation4], 1
    %134 = vsyncpa [#allocation9], 1

</llo_original>
